<compile_context>
chip_gen: v6e
topology: v6e:2x2x1
jax: 0.10.0
libtpu: 0.0.40
codegen_flags: <defaults>
</compile_context>

<pallas_src>
import numpy as np
import jax
import jax.numpy as jnp
from jax.experimental import pallas as pl
from jax.experimental.pallas import tpu as pltpu

KH = KW = 3  # synthetic model kernel size


def _round_up(a, m):
    return (a + m - 1) // m * m


def _pick_nb(N, H, target_m=256):
    """Images per grid step: fill the MXU M dim (~target_m rows) but keep the
    parallel grid length >= 2 so v7x uses both TensorCores and DMA overlaps."""
    cap = max(1, target_m // max(H, 1))
    if N >= 2:
        cap = min(cap, N // 2)
    cap = max(1, min(cap, N))
    for d in range(cap, 0, -1):
        if N % d == 0:
            return d
    return 1


def _make_kernel(NB, H, K, CoW_pad):
    def kernel(s_ref, brow_ref, xp_ref, o_ref):
        # s_ref   : (KH, K, CoW_pad)  bf16  flip-folded, block-diag-channel conv weights
        # brow_ref: (1, CoW_pad)      f32   bias replicated along W (zeros in pad cols)
        # xp_ref  : (NB, Hp_pad, K)   bf16  lane-packed zero-padded input images
        # o_ref   : (NB*H, CoW_pad)   f32   TTA logits, lane-dense 128-wide layout
        acc = jnp.broadcast_to(brow_ref[...], (NB * H, CoW_pad))   # start from bias
        for dy in range(KH):  # 3 unrolled MXU dots: (NB*H, K) @ (K, CoW_pad)
            a = xp_ref[:, dy:dy + H, :].reshape(NB * H, K)          # sublane row shift
            acc = acc + jnp.dot(a, s_ref[dy], preferred_element_type=jnp.float32)
        o_ref[...] = acc
    return kernel


def tta_fliplr_forward(x, w, b, target_m=256):
    """x: (N, Ci, H, W) f32; w: (Co, Ci, 3, 3) f32; b: (Co,) f32 -> (N, Co, H, W)."""
    N, Ci, H, W = x.shape
    Co = w.shape[0]
    Hp, Wp = H + 2, W + 2

    # Lane-pack channels into K: pad Wp so K = Ci*Wp_pad hits a multiple of 128
    # when possible; pad Hp to a multiple of 8 so per-image sublane tiles align.
    Wp_pad = _round_up(Wp, 128 // Ci) if 128 % Ci == 0 else _round_up(Wp, 8)
    Hp_pad = _round_up(Hp, 8)
    K = Ci * Wp_pad
    CoW = Co * W
    CoW_pad = _round_up(CoW, 128)       # 128-lane output -> unmasked full stores
    NB = _pick_nb(N, H, target_m)

    # ---------------- weight-side preprocessing (data independent) ----------------
    w = w.astype(jnp.float32)
    b = b.astype(jnp.float32)
    # Fold horizontal-flip TTA into the conv weights (exact for zero padding):
    #   0.5*(conv(x,w) + hflip(conv(hflip(x),w))) == conv(x, 0.5*(w + flip_kw(w)))
    w_sym = 0.5 * (w + w[..., ::-1])                               # (Co, Ci, KH, KW)

    # Tap-placement tensor: T[dx, p, j] = [p == j + dx]
    T_np = np.zeros((KW, Wp_pad, W), np.float32)
    eye = np.eye(W, dtype=np.float32)
    for dx in range(KW):
        T_np[dx, dx:dx + W, :] = eye
    T = jnp.asarray(T_np)

    # S[dy, c*Wp_pad + p, o*W + j] = sum_dx w_sym[o,c,dy,dx] * [p == j + dx]
    S = (w_sym.transpose(2, 1, 3, 0)[:, :, :, None, :, None]      # (KH,Ci,KW,1,Co,1)
         * T[None, None, :, :, None, :]                           # (1,1,KW,Wp_pad,1,W)
         ).sum(axis=2)                                            # (KH,Ci,Wp_pad,Co,W)
    S = S.reshape(KH, K, CoW)
    S = jnp.pad(S, ((0, 0), (0, 0), (0, CoW_pad - CoW))).astype(jnp.bfloat16)
    # TODO(synk): at segmentation-scale W the banded S grows O(W^2); switch to
    # pltpu.roll lane shifts against dense (W, Co*W) weights to keep S VMEM-resident.

    brow = jnp.pad(jnp.repeat(b, W), (0, CoW_pad - CoW))[None, :]  # (1, CoW_pad) f32

    # ---------------- data-side glue: pad + lane-pack to (N, Hp_pad, K) bf16 -------
    xpad = jnp.pad(x.astype(jnp.float32),
                   ((0, 0), (0, 0), (1, Hp_pad - H - 1), (1, Wp_pad - W - 1)))
    xpk = xpad.transpose(0, 2, 1, 3).reshape(N, Hp_pad, K).astype(jnp.bfloat16)

    kernel = _make_kernel(NB, H, K, CoW_pad)

    # Explicit VMEM budget (double-buffered blocks) so tilings stay inside v7x's 64 MiB.
    blk_bytes = (KH * K * CoW_pad * 2 + 8 * CoW_pad * 4
                 + NB * Hp_pad * K * 2 + NB * H * CoW_pad * 4)
    vmem_limit = int(min(64 << 20, max(32 << 20, 2 * blk_bytes + (2 << 20))))

    grid_spec = pltpu.PrefetchScalarGridSpec(
        num_scalar_prefetch=0,
        grid=(N // NB,),
        in_specs=[
            pl.BlockSpec((KH, K, CoW_pad), lambda i: (0, 0, 0)),    # weights, resident
            pl.BlockSpec((1, CoW_pad), lambda i: (0, 0)),           # bias row, resident
            pl.BlockSpec((NB, Hp_pad, K), lambda i: (i, 0, 0)),     # NB images / step
        ],
        out_specs=pl.BlockSpec((NB * H, CoW_pad), lambda i: (i, 0)),
    )

    out_flat = pl.pallas_call(
        kernel,
        out_shape=jax.ShapeDtypeStruct((N * H, CoW_pad), jnp.float32),
        grid_spec=grid_spec,
        compiler_params=pltpu.CompilerParams(
            dimension_semantics=("parallel",),   # batch steps are independent
            vmem_limit_bytes=vmem_limit),
    )(S, brow, xpk)

    # Layout plumbing only: (N*H, CoW_pad) -> (N, Co, H, W)
    return out_flat[:, :CoW].reshape(N, H, Co, W).transpose(0, 2, 1, 3)


def reference_forward(x, w, b):
    """Pure-JAX reference of TTAWrapperD4 with the synthetic conv model."""
    def model(z):
        y = jax.lax.conv_general_dilated(
            z, w, window_strides=(1, 1), padding=((1, 1), (1, 1)),
            dimension_numbers=("NCHW", "OIHW", "NCHW"),
            precision=jax.lax.Precision.HIGHEST)
        return y + b[None, :, None, None]
    return 0.5 * (model(x) + jnp.flip(model(jnp.flip(x, axis=3)), axis=3))


if __name__ == "__main__":
    key = jax.random.PRNGKey(0)
    kx, kw, kb = jax.random.split(key, 3)

    N, Ci, H, W = 2, 4, 16, 16
    Co = 4  # number of mask classes emitted by the synthetic model

    x = jax.random.normal(kx, (N, Ci, H, W), dtype=jnp.float32)
    w = 0.1 * jax.random.normal(kw, (Co, Ci, 3, 3), dtype=jnp.float32)
    b = 0.1 * jax.random.normal(kb, (Co,), dtype=jnp.float32)

    out = tta_fliplr_forward(x, w, b)
    out = jax.block_until_ready(out)

    ref = reference_forward(x, w, b)
    assert out.shape == (N, Co, H, W)
    max_err = float(jnp.max(jnp.abs(out - ref)))
    # bf16 MXU inputs with f32 accumulation (per perf review): tolerance sized
    # for bf16 rounding; typical max abs err is ~2e-3 at these magnitudes.
    assert bool(jnp.allclose(out, ref, rtol=1e-2, atol=1e-2)), \
        f"mismatch vs reference (max abs err {max_err})"

    print("KERNEL_OK")
</pallas_src>

<mosaic_0001>
module attributes {stable_mosaic.version = 11 : i64} {
  func.func @kernel(%arg0: i32, %arg1: memref<3x128x128xbf16, #tpu.memory_space<vmem>>, %arg2: memref<1x128xf32, #tpu.memory_space<vmem>>, %arg3: memref<1x24x128xbf16, #tpu.memory_space<vmem>>, %arg4: memref<16x128xf32, #tpu.memory_space<vmem>>) attributes {dimension_semantics = [#tpu.dimension_semantics<parallel>], iteration_bounds = array<i64: 2>, scalar_prefetch = 0 : i64, scratch_operands = 0 : i64, tpu.core_type = #tpu.core_type<tc>, window_params = [{pipeline_mode = #tpu.pipeline_mode<synchronous>, transform_indices = @transform_0, window_bounds = array<i64: 3, 128, 128>}, {pipeline_mode = #tpu.pipeline_mode<synchronous>, transform_indices = @transform_1, window_bounds = array<i64: 1, 128>}, {transform_indices = @transform_2, window_bounds = array<i64: 1, 24, 128>}, {transform_indices = @transform_3, window_bounds = array<i64: 16, 128>}]} {
    %c0 = arith.constant 0 : index
    %c0_0 = arith.constant 0 : index
    %0 = vector.load %arg2[%c0, %c0_0] : memref<1x128xf32, #tpu.memory_space<vmem>>, vector<1x128xf32>
    %1 = vector.shape_cast %0 : vector<1x128xf32> to vector<1x128xf32>
    %2 = vector.broadcast %1 : vector<1x128xf32> to vector<16x128xf32>
    %c0_1 = arith.constant 0 : index
    %c0_2 = arith.constant 0 : index
    %c0_3 = arith.constant 0 : index
    %3 = vector.load %arg3[%c0_1, %c0_2, %c0_3] : memref<1x24x128xbf16, #tpu.memory_space<vmem>>, vector<1x16x128xbf16>
    %4 = vector.shape_cast %3 : vector<1x16x128xbf16> to vector<16x128xbf16>
    %c0_4 = arith.constant 0 : index
    %c0_5 = arith.constant 0 : index
    %c0_6 = arith.constant 0 : index
    %5 = vector.load %arg1[%c0_4, %c0_5, %c0_6] : memref<3x128x128xbf16, #tpu.memory_space<vmem>>, vector<1x128x128xbf16>
    %6 = vector.shape_cast %5 : vector<1x128x128xbf16> to vector<128x128xbf16>
    %cst = arith.constant dense<0.000000e+00> : vector<16x128xf32>
    %7 = tpu.matmul %4, %6, %cst {dimension_numbers = #tpu.dot_dimension_numbers<[1], [0], [0], [1], [0, 0, 1, 1], [], []>} : vector<16x128xbf16>, vector<128x128xbf16>, vector<16x128xf32> -> vector<16x128xf32>
    %8 = arith.addf %2, %7 : vector<16x128xf32>
    %c0_7 = arith.constant 0 : index
    %c1 = arith.constant 1 : index
    %c0_8 = arith.constant 0 : index
    %9 = vector.load %arg3[%c0_7, %c1, %c0_8] : memref<1x24x128xbf16, #tpu.memory_space<vmem>>, vector<1x16x128xbf16>
    %10 = vector.shape_cast %9 : vector<1x16x128xbf16> to vector<16x128xbf16>
    %c1_9 = arith.constant 1 : index
    %c0_10 = arith.constant 0 : index
    %c0_11 = arith.constant 0 : index
    %11 = vector.load %arg1[%c1_9, %c0_10, %c0_11] : memref<3x128x128xbf16, #tpu.memory_space<vmem>>, vector<1x128x128xbf16>
    %12 = vector.shape_cast %11 : vector<1x128x128xbf16> to vector<128x128xbf16>
    %cst_12 = arith.constant dense<0.000000e+00> : vector<16x128xf32>
    %13 = tpu.matmul %10, %12, %cst_12 {dimension_numbers = #tpu.dot_dimension_numbers<[1], [0], [0], [1], [0, 0, 1, 1], [], []>} : vector<16x128xbf16>, vector<128x128xbf16>, vector<16x128xf32> -> vector<16x128xf32>
    %14 = arith.addf %8, %13 : vector<16x128xf32>
    %c0_13 = arith.constant 0 : index
    %c2 = arith.constant 2 : index
    %c0_14 = arith.constant 0 : index
    %15 = vector.load %arg3[%c0_13, %c2, %c0_14] : memref<1x24x128xbf16, #tpu.memory_space<vmem>>, vector<1x16x128xbf16>
    %16 = vector.shape_cast %15 : vector<1x16x128xbf16> to vector<16x128xbf16>
    %c2_15 = arith.constant 2 : index
    %c0_16 = arith.constant 0 : index
    %c0_17 = arith.constant 0 : index
    %17 = vector.load %arg1[%c2_15, %c0_16, %c0_17] : memref<3x128x128xbf16, #tpu.memory_space<vmem>>, vector<1x128x128xbf16>
    %18 = vector.shape_cast %17 : vector<1x128x128xbf16> to vector<128x128xbf16>
    %cst_18 = arith.constant dense<0.000000e+00> : vector<16x128xf32>
    %19 = tpu.matmul %16, %18, %cst_18 {dimension_numbers = #tpu.dot_dimension_numbers<[1], [0], [0], [1], [0, 0, 1, 1], [], []>} : vector<16x128xbf16>, vector<128x128xbf16>, vector<16x128xf32> -> vector<16x128xf32>
    %20 = arith.addf %14, %19 : vector<16x128xf32>
    %c0_19 = arith.constant 0 : index
    %c0_20 = arith.constant 0 : index
    %21 = vector.load %arg4[%c0_19, %c0_20] : memref<16x128xf32, #tpu.memory_space<vmem>>, vector<16x128xf32>
    tpu.vector_store %arg4[%c0_19, %c0_20], %20 {strides = array<i32>} : memref<16x128xf32, #tpu.memory_space<vmem>>, vector<16x128xf32>,
    return
  }
  func.func @transform_0(%arg0: i32) -> (i32, i32, i32) {
    %c0_i32 = arith.constant 0 : i32
    %c0_i32_0 = arith.constant 0 : i32
    %c0_i32_1 = arith.constant 0 : i32
    %c0_i32_2 = arith.constant 0 : i32
    return %c0_i32, %c0_i32_0, %c0_i32_1 : i32, i32, i32
  }
  func.func @transform_1(%arg0: i32) -> (i32, i32) {
    %c0_i32 = arith.constant 0 : i32
    %c0_i32_0 = arith.constant 0 : i32
    %c0_i32_1 = arith.constant 0 : i32
    return %c0_i32, %c0_i32_0 : i32, i32
  }
  func.func @transform_2(%arg0: i32) -> (i32, i32, i32) {
    %c0_i32 = arith.constant 0 : i32
    %c0_i32_0 = arith.constant 0 : i32
    %c0_i32_1 = arith.constant 0 : i32
    return %arg0, %c0_i32, %c0_i32_0 : i32, i32, i32
  }
  func.func @transform_3(%arg0: i32) -> (i32, i32) {
    %c0_i32 = arith.constant 0 : i32
    %c0_i32_0 = arith.constant 0 : i32
    return %arg0, %c0_i32 : i32, i32
  }
}

</mosaic_0001>

<llo_original>
// kernel: tpu_custom_call.1
$region0: #{tpu_custom_call.1}
  #allocation0 [shape = 'u32[]', space=smem, size = 0x4, offset = 0x4, fixed_abs, tag = 'smem constant byte address 0x4 - core index']
  #allocation1 [shape = 'u32[144,128]{1,0:T(1,128)}', space=vmem, size = 0x12000, scoped, tag = 'internal scratch']
  %s0 = inlined_call_operand.hbm [shape: bf16[3,128,128], index: 0, kind: input, shape index: {}]
  %s1 = inlined_call_operand.vmem [shape: f32[1,128], index: 1, kind: input, shape index: {}]
  %s2 = inlined_call_operand.hbm [shape: bf16[2,24,128], index: 2, kind: input, shape index: {}]
  %s3 = inlined_call_operand.hbm [shape: f32[32,128], index: 3, kind: output, shape index: {}]
  %s4 = sld [smem:[#allocation0]]
  $region53: #{tpu_custom_call.1} parent=0
    _
  %s6 = ssub.s32 1, %s4
  %s7 = scalar_select 0, %s6, %s4
  $region1: #{tpu_custom_call.1} parent=0
    #allocation2 [shape = 'u8[98304]{0}', space=vmem, size = 0x18000, scoped, tag = 'input window, operand 0, single buffered']
    #allocation3 [shape = 's32[2]{0}', space=sflag, size = 0x8, scoped, tag = 'scoped memory for tpu_custom_call.1']
    #allocation4 [shape = 's32[2]{0}', space=sflag, size = 0x8, scoped, tag = 'scoped memory for tpu_custom_call.1']
    #allocation5 [shape = 'u8[12288]{0}', space=vmem, size = 0x3000, scoped, tag = 'input window, operand 2']
    #allocation6 [shape = 's32[2]{0}', space=sflag, size = 0x8, scoped, tag = 'scoped memory for tpu_custom_call.1']
    #allocation7 [shape = 'u8[16384]{0}', space=vmem, size = 0x4000, scoped, tag = 'output window, operand 0']
    %8 = vsyncpa [#allocation3], 0
    %9 = vsyncpa [#allocation6], 0
    %s10 = scalar_lea.sflag [#allocation6], 1
    %11 = vsyncpa %s10, 0
    %12 = vsyncpa [#allocation4], 0
    %s13 = scalar_lea.sflag [#allocation4], 1
    %14 = vsyncpa %s13, 0
    loop: start=0, step=1, limit=4
    $region2: #{tpu_custom_call.1} parent=1 // loop_pre_header
      _
    $region3: #{tpu_custom_call.1} parent=1 // loop_header
      %s16 = sphi 0, %s20
      %p17 = scmp.ge.s32.totalorder %s16, 4
      %s24 = sphi 0, %s24
      %s26 = sphi 0, %s24
      %s27 = sphi 0, %s26
      %s41 = sphi 0, %s27
      %s45 = sphi 0, %s45
      %s47 = sphi 0, %s45
      %s48 = sphi 0, %s47
      %s62 = sphi 0, %s48
      %s68 = sphi 0, %s70
      %s71 = sphi 0, %s68
      %s72 = sphi 0, %s71
      %s88 = sphi 0, %s72
      %s94 = sphi 0, %s96
      %s97 = sphi 0, %s94
      %s98 = sphi 0, %s97
      %s114 = sphi 0, %s98
    $region4: #{tpu_custom_call.1} parent=1 // loop_header_branch
      %19 = sbr.rel (%p17) target = $region8
    $region5: #{tpu_custom_call.1} parent=1 // loop_body
      %s21 = ssub.s32 %s16, 1
      %s22 = ssub.s32 %s16, 2
      %s23 = sadd.s32 %s16, 1
      %s25 = sadd.s32 %s24, 1
      %p28 = scmp.eq.s32.totalorder %s16, 1
      %p29 = scmp.ne.s32.totalorder %s24, %s26
      %p30 = scmp.eq.s32.totalorder %s16, 0
      %p31 = por %p29, %p30
      %p32 = scmp.ne.s32.totalorder %s24, %s26
      %p33 = scmp.eq.s32.totalorder %s21, 1
      %p34 = por %p32, %p33
      %p35 = scmp.ne.s32.totalorder %s26, %s27
      %p36 = scmp.eq.s32.totalorder %s21, 0
      %p37 = por %p35, %p36
      %p38 = scmp.ne.s32.totalorder %s26, %s27
      %p39 = scmp.eq.s32.totalorder %s22, 1
      %p40 = por %p38, %p39
      %p42 = scmp.ne.s32.totalorder %s27, %s41
      %p43 = scmp.eq.s32.totalorder %s22, 0
      %p44 = por %p42, %p43
      %s46 = sadd.s32 %s45, 1
      %p49 = scmp.eq.s32.totalorder %s16, 1
      %p50 = scmp.ne.s32.totalorder %s45, %s47
      %p51 = scmp.eq.s32.totalorder %s16, 0
      %p52 = por %p50, %p51
      %p53 = scmp.ne.s32.totalorder %s45, %s47
      %p54 = scmp.eq.s32.totalorder %s21, 1
      %p55 = por %p53, %p54
      %p56 = scmp.ne.s32.totalorder %s47, %s48
      %p57 = scmp.eq.s32.totalorder %s21, 0
      %p58 = por %p56, %p57
      %p59 = scmp.ne.s32.totalorder %s47, %s48
      %p60 = scmp.eq.s32.totalorder %s22, 1
      %p61 = por %p59, %p60
      %p63 = scmp.ne.s32.totalorder %s48, %s62
      %p64 = scmp.eq.s32.totalorder %s22, 0
      %p65 = por %p63, %p64
      %s66 = ssub.s32 %s16, %s23
      %p67 = scmp.eq.s32.totalorder %s66, 0
      %s69 = sadd.s32 %s68, 1
      %s70 = scalar_select %p67, %s68, %s69
      %p73 = pneg %p67
      %p74 = scmp.eq.s32.totalorder %s16, 1
      %p75 = por %p73, %p74
      %p76 = scmp.ne.s32.totalorder %s68, %s71
      %p77 = scmp.eq.s32.totalorder %s16, 0
      %p78 = por %p76, %p77
      %p79 = scmp.ne.s32.totalorder %s68, %s71
      %p80 = scmp.eq.s32.totalorder %s21, 1
      %p81 = por %p79, %p80
      %p82 = scmp.ne.s32.totalorder %s71, %s72
      %p83 = scmp.eq.s32.totalorder %s21, 0
      %p84 = por %p82, %p83
      %p85 = scmp.ne.s32.totalorder %s71, %s72
      %p86 = scmp.eq.s32.totalorder %s22, 1
      %p87 = por %p85, %p86
      %p89 = scmp.ne.s32.totalorder %s72, %s88
      %p90 = scmp.eq.s32.totalorder %s22, 0
      %p91 = por %p89, %p90
      %s92 = ssub.s32 %s16, %s23
      %p93 = scmp.eq.s32.totalorder %s92, 0
      %s95 = sadd.s32 %s94, 1
      %s96 = scalar_select %p93, %s94, %s95
      %p99 = pneg %p93
      %p100 = scmp.eq.s32.totalorder %s16, 1
      %p101 = por %p99, %p100
      %p102 = scmp.ne.s32.totalorder %s94, %s97
      %p103 = scmp.eq.s32.totalorder %s16, 0
      %p104 = por %p102, %p103
      %p105 = scmp.ne.s32.totalorder %s94, %s97
      %p106 = scmp.eq.s32.totalorder %s21, 1
      %p107 = por %p105, %p106
      %p108 = scmp.ne.s32.totalorder %s97, %s98
      %p109 = scmp.eq.s32.totalorder %s21, 0
      %p110 = por %p108, %p109
      %p111 = scmp.ne.s32.totalorder %s97, %s98
      %p112 = scmp.eq.s32.totalorder %s22, 1
      %p113 = por %p111, %p112
      %p115 = scmp.ne.s32.totalorder %s98, %s114
      %p116 = scmp.eq.s32.totalorder %s22, 0
      %p117 = por %p115, %p116
      %p118 = scmp.le.s32.totalorder 1, %s16
      %p119 = scmp.lt.s32.totalorder %s16, 3
      %p120 = pnand %p118, %p119
      %p121 = pneg %p120
      // Predicated region
      $region9: #{tpu_custom_call.1} parent=5 // pred_check
        _
      $region10: #{tpu_custom_call.1} parent=5 // pred_check_branch
        %123 = sbr.rel (%p120) target = $region12
      $region11: #{tpu_custom_call.1} parent=5 // pred_region
        %s124 = ssub.s32 %s16, 1
        // Predicated region
        $region13: #{tpu_custom_call.1} parent=11 // pred_check
          %p125 = pneg %p37
        $region14: #{tpu_custom_call.1} parent=11 // pred_check_branch
          %127 = sbr.rel (%p125) target = $region16
        $region15: #{tpu_custom_call.1} parent=11 // pred_region
          %s129 = ssub.s32 3072, 3072
          %130 = vsyncadd [#allocation3], %s129
          %s131 = sshll.u32 [#allocation2], 4
          %s132 = int_to_ptr.vmem [resolvable:$true] %s131
          %137 = dma.hbm_to_vmem [thread:$0]  %s0, 3072, %s132, [#allocation3], 64, 64, 4
        $region16: #{tpu_custom_call.1} parent=11 // pred_fallthru
          _
        // Predicated region
        $region17: #{tpu_custom_call.1} parent=11 // pred_check
          %p138 = pneg %p58
        $region18: #{tpu_custom_call.1} parent=11 // pred_check_branch
          %140 = sbr.rel (%p138) target = $region20
        $region19: #{tpu_custom_call.1} parent=11 // pred_region
          _
        $region20: #{tpu_custom_call.1} parent=11 // pred_fallthru
          _
      $region12: #{tpu_custom_call.1} parent=5 // pred_fallthru
        _
      %p141 = scmp.lt.s32.totalorder %s16, 2
      // Predicated region
      $region21: #{tpu_custom_call.1} parent=5 // pred_check
        %p142 = pneg %p141
      $region22: #{tpu_custom_call.1} parent=5 // pred_check_branch
        %144 = sbr.rel (%p142) target = $region24
      $region23: #{tpu_custom_call.1} parent=5 // pred_region
        // Predicated region
        $region25: #{tpu_custom_call.1} parent=23 // pred_check
          %p145 = pneg %p78
        $region26: #{tpu_custom_call.1} parent=23 // pred_check_branch
          %147 = sbr.rel (%p145) target = $region28
        $region27: #{tpu_custom_call.1} parent=23 // pred_region
          %s148 = sand.u32 %s68, 1
          %s149 = scalar_lea.sflag [#allocation6], %s148
          %s150 = sand.u32 %s68, 1
          %s151 = smul.addr %s150, 12
          %s152 = scalar_lea.vmem [#allocation5], %s151
          %s154 = ssub.s32 192, 192
          %155 = vsyncadd %s149, %s154
          %s156 = smul.addr %s16, 3
          %s157 = smul.addr %s156, 64
          %s158 = scalar_lea.hbm %s2, %s157
          %s159 = sshll.u32 %s152, 4
          %s160 = int_to_ptr.vmem [resolvable:$true] %s159
          %165 = dma.hbm_to_vmem [thread:$0]  %s158, 192, %s160, %s149, 64, 64, 4
        $region28: #{tpu_custom_call.1} parent=23 // pred_fallthru
          _
      $region24: #{tpu_custom_call.1} parent=5 // pred_fallthru
        _
      %p166 = scmp.le.s32.totalorder 1, %s16
      %p167 = scmp.lt.s32.totalorder %s16, 3
      %p168 = pnand %p166, %p167
      %p169 = pneg %p168
      // Predicated region
      $region29: #{tpu_custom_call.1} parent=5 // pred_check
        _
      $region30: #{tpu_custom_call.1} parent=5 // pred_check_branch
        %171 = sbr.rel (%p168) target = $region32
      $region31: #{tpu_custom_call.1} parent=5 // pred_region
        %s172 = ssub.s32 %s16, 1
        // Predicated region
        $region33: #{tpu_custom_call.1} parent=31 // pred_check
          %p173 = pneg %p37
        $region34: #{tpu_custom_call.1} parent=31 // pred_check_branch
          %175 = sbr.rel (%p173) target = $region36
        $region35: #{tpu_custom_call.1} parent=31 // pred_region
          %176 = dma.done [#allocation3], 3072
        $region36: #{tpu_custom_call.1} parent=31 // pred_fallthru
          _
        %s177 = sand.u32 %s71, 1
        %s178 = scalar_lea.sflag [#allocation6], %s177
        %s179 = sand.u32 %s71, 1
        %s180 = smul.addr %s179, 12
        %s181 = scalar_lea.vmem [#allocation5], %s180
        // Predicated region
        $region37: #{tpu_custom_call.1} parent=31 // pred_check
          %p182 = pneg %p84
        $region38: #{tpu_custom_call.1} parent=31 // pred_check_branch
          %184 = sbr.rel (%p182) target = $region40
        $region39: #{tpu_custom_call.1} parent=31 // pred_region
          %185 = dma.done %s178, 192
        $region40: #{tpu_custom_call.1} parent=31 // pred_fallthru
          _
        %p186 = pneg %p37
        %p187 = pneg %p34
        %p188 = pneg %p58
        %p189 = pneg %p55
        %s190 = sand.u32 %s71, 1
        %s191 = scalar_lea.sflag [#allocation6], %s190
        %s192 = sand.u32 %s71, 1
        %s193 = smul.addr %s192, 12
        %s194 = scalar_lea.vmem [#allocation5], %s193
        %p195 = pneg %p84
        %p196 = pneg %p81
        %p197 = pneg %p110
        %p198 = pneg %p107
        %s199 = sand.u32 %s97, 1
        %s200 = scalar_lea.sflag [#allocation4], %s199
        %s201 = sand.u32 %s97, 1
        %s202 = smul.addr %s201, 16
        %s203 = scalar_lea.vmem [#allocation7], %s202
        %s204 = smul.u32 2, %s21
        %v206 = vld [vmem:[%s1] sm:$0x1]
        %v208 = vlaneseq
        %v209 = vshrl.u32 %v208, 7
        %v210 = vsub.s32 0, %v209
        %v211 = vrot.slane %v206, %v210
        %v213 = vld [vmem:[%s181] sm:$0xf]
        %v214 = vld [vmem:[%s181 + $0x4] sm:$0xf]
        %v215 = vld [vmem:[#allocation2] sm:$0xf]
        %v216 = vld [vmem:[#allocation2 + $0x4] sm:$0xf]
        %v217 = vld [vmem:[#allocation2 + $0x8] sm:$0xf]
        %v218 = vld [vmem:[#allocation2 + $0xc] sm:$0xf]
        %v219 = vld [vmem:[#allocation2 + $0x10] sm:$0xf]
        %v220 = vld [vmem:[#allocation2 + $0x14] sm:$0xf]
        %v221 = vld [vmem:[#allocation2 + $0x18] sm:$0xf]
        %v222 = vld [vmem:[#allocation2 + $0x1c] sm:$0xf]
        %v223 = vld [vmem:[#allocation2 + $0x20] sm:$0xf]
        %v224 = vld [vmem:[#allocation2 + $0x24] sm:$0xf]
        %v225 = vld [vmem:[#allocation2 + $0x28] sm:$0xf]
        %v226 = vld [vmem:[#allocation2 + $0x2c] sm:$0xf]
        %v227 = vld [vmem:[#allocation2 + $0x30] sm:$0xf]
        %v228 = vld [vmem:[#allocation2 + $0x34] sm:$0xf]
        %v229 = vld [vmem:[#allocation2 + $0x38] sm:$0xf]
        %v230 = vld [vmem:[#allocation2 + $0x3c] sm:$0xf]
        %v233 = vunpack.c.l.b16 %v213
        %v234 = vunpack.c.l.b16 %v214
        %v235 = vpack.c.b16 %v234, %v233
        %v253 = vunpack.c.l.b16 %v215
        %v254 = vunpack.c.l.b16 %v216
        %v255 = vunpack.c.l.b16 %v217
        %v256 = vunpack.c.l.b16 %v218
        %v257 = vunpack.c.l.b16 %v219
        %v258 = vunpack.c.l.b16 %v220
        %v259 = vunpack.c.l.b16 %v221
        %v260 = vunpack.c.l.b16 %v222
        %v261 = vunpack.c.l.b16 %v223
        %v262 = vunpack.c.l.b16 %v224
        %v263 = vunpack.c.l.b16 %v225
        %v264 = vunpack.c.l.b16 %v226
        %v265 = vunpack.c.l.b16 %v227
        %v266 = vunpack.c.l.b16 %v228
        %v267 = vunpack.c.l.b16 %v229
        %v268 = vunpack.c.l.b16 %v230
        %v269 = vpack.c.b16 %v254, %v253
        %v270 = vpack.c.b16 %v256, %v255
        %v271 = vpack.c.b16 %v258, %v257
        %v272 = vpack.c.b16 %v260, %v259
        %v273 = vpack.c.b16 %v262, %v261
        %v274 = vpack.c.b16 %v264, %v263
        %v275 = vpack.c.b16 %v266, %v265
        %v276 = vpack.c.b16 %v268, %v267
        %285 = vmatprep.subr.bf16.mxu0 0
        %286 = vmatpush1.bf16.msra.mxu0 %v276
        %287 = vmatprep.subr.bf16.mxu0 0
        %288 = vmatpush1.bf16.msra.mxu0 %v275
        %289 = vmatprep.subr.bf16.mxu0 0
        %290 = vmatpush1.bf16.msra.mxu0 %v274
        %291 = vmatprep.subr.bf16.mxu0 0
        %292 = vmatpush1.bf16.msra.mxu0 %v273
        %293 = vmatprep.subr.bf16.mxu0 0
        %294 = vmatpush1.bf16.msra.mxu0 %v272
        %295 = vmatprep.subr.bf16.mxu0 0
        %296 = vmatpush1.bf16.msra.mxu0 %v271
        %297 = vmatprep.subr.bf16.mxu0 0
        %298 = vmatpush1.bf16.msra.mxu0 %v270
        %299 = vmatprep.subr.bf16.mxu0 0
        %300 = vmatpush1.bf16.msra.mxu0 %v269
        %301 = vmatprep.subr.bf16.mxu0 0
        %302 = vmatpush2.bf16.msra.mxu0 0
        %303 = vmatprep.subr.bf16.mxu0 0
        %304 = vmatpush2.bf16.msra.mxu0 0
        %305 = vmatprep.subr.bf16.mxu0 0
        %306 = vmatpush2.bf16.msra.mxu0 0
        %307 = vmatprep.subr.bf16.mxu0 0
        %308 = vmatpush2.bf16.msra.mxu0 0
        %309 = vmatprep.subr.bf16.mxu0 0
        %310 = vmatpush2.bf16.msra.mxu0 0
        %311 = vmatprep.subr.bf16.mxu0 0
        %312 = vmatpush2.bf16.msra.mxu0 0
        %313 = vmatprep.subr.bf16.mxu0 0
        %314 = vmatpush2.bf16.msra.mxu0 0
        %315 = vmatprep.subr.bf16.mxu0 0
        %316 = vmatpush2.bf16.msra.mxu0 0
        %317 = vmatprep.mubr.bf16.mxu0 0
        %318 = vmatmul.mubr.bf16.gmra.mxu0 %v235
        %v319 = vpop.f32.mrf.mxu0
        %v320 = vadd.f32 0.0, %v319
        %v321 = vpop.f32.mrf.mxu0
        %v322 = vpop.f32.mrf.mxu0
        %v323 = vadd.f32 0.0, %v322
        %v324 = vpop.f32.mrf.mxu0
        %325 = vdwg.mxu0
        %v326 = vadd.f32 %v211, %v320
        %v327 = vadd.f32 %v211, %v323
        %v328 = vld [vmem:[%s181] sm:$0xf]
        %v329 = vld [vmem:[%s181 + $0x4] sm:$0xf]
        %v330 = vld [vmem:[%s181 + $0x8] sm:$0x1]
        %s331 = scalar_lea.vmem [#allocation2], 64
        %v332 = vld [vmem:[%s331] sm:$0xf]
        %v333 = vld [vmem:[%s331 + $0x4] sm:$0xf]
        %v334 = vld [vmem:[%s331 + $0x8] sm:$0xf]
        %v335 = vld [vmem:[%s331 + $0xc] sm:$0xf]
        %v336 = vld [vmem:[%s331 + $0x10] sm:$0xf]
        %v337 = vld [vmem:[%s331 + $0x14] sm:$0xf]
        %v338 = vld [vmem:[%s331 + $0x18] sm:$0xf]
        %v339 = vld [vmem:[%s331 + $0x1c] sm:$0xf]
        %v340 = vld [vmem:[%s331 + $0x20] sm:$0xf]
        %v341 = vld [vmem:[%s331 + $0x24] sm:$0xf]
        %v342 = vld [vmem:[%s331 + $0x28] sm:$0xf]
        %v343 = vld [vmem:[%s331 + $0x2c] sm:$0xf]
        %v344 = vld [vmem:[%s331 + $0x30] sm:$0xf]
        %v345 = vld [vmem:[%s331 + $0x34] sm:$0xf]
        %v346 = vld [vmem:[%s331 + $0x38] sm:$0xf]
        %v347 = vld [vmem:[%s331 + $0x3c] sm:$0xf]
        %v351 = vunpack.c.l.b16 %v328
        %v352 = vunpack.c.l.b16 %v329
        %v353 = vunpack.c.l.b16 %v330
        %v354 = vpack.c.b16 %v352, %v351
        %v355 = vpack.c.b16 %v353, %v353
        %vm356 = vsmask.f32 7424
        %v358 = vshrl.u32 %v354, 16
        %v360 = vshll.u32 %v354, 16
        %v362 = vrot.slane %v360, 1
        %v363 = vor.u32 %v358, %v362
        %v365 = vshll.u32 %v355, 16
        %v367 = vrot.slane %v365, 1
        %v368 = vsel %vm356, %v363, %v367
        %v386 = vunpack.c.l.b16 %v332
        %v387 = vunpack.c.l.b16 %v333
        %v388 = vunpack.c.l.b16 %v334
        %v389 = vunpack.c.l.b16 %v335
        %v390 = vunpack.c.l.b16 %v336
        %v391 = vunpack.c.l.b16 %v337
        %v392 = vunpack.c.l.b16 %v338
        %v393 = vunpack.c.l.b16 %v339
        %v394 = vunpack.c.l.b16 %v340
        %v395 = vunpack.c.l.b16 %v341
        %v396 = vunpack.c.l.b16 %v342
        %v397 = vunpack.c.l.b16 %v343
        %v398 = vunpack.c.l.b16 %v344
        %v399 = vunpack.c.l.b16 %v345
        %v400 = vunpack.c.l.b16 %v346
        %v401 = vunpack.c.l.b16 %v347
        %v402 = vpack.c.b16 %v387, %v386
        %v403 = vpack.c.b16 %v389, %v388
        %v404 = vpack.c.b16 %v391, %v390
        %v405 = vpack.c.b16 %v393, %v392
        %v406 = vpack.c.b16 %v395, %v394
        %v407 = vpack.c.b16 %v397, %v396
        %v408 = vpack.c.b16 %v399, %v398
        %v409 = vpack.c.b16 %v401, %v400
        %418 = vmatprep.subr.bf16.mxu0 0
        %419 = vmatpush1.bf16.msra.mxu0 %v409
        %420 = vmatprep.subr.bf16.mxu0 0
        %421 = vmatpush1.bf16.msra.mxu0 %v408
        %422 = vmatprep.subr.bf16.mxu0 0
        %423 = vmatpush1.bf16.msra.mxu0 %v407
        %424 = vmatprep.subr.bf16.mxu0 0
        %425 = vmatpush1.bf16.msra.mxu0 %v406
        %426 = vmatprep.subr.bf16.mxu0 0
        %427 = vmatpush1.bf16.msra.mxu0 %v405
        %428 = vmatprep.subr.bf16.mxu0 0
        %429 = vmatpush1.bf16.msra.mxu0 %v404
        %430 = vmatprep.subr.bf16.mxu0 0
        %431 = vmatpush1.bf16.msra.mxu0 %v403
        %432 = vmatprep.subr.bf16.mxu0 0
        %433 = vmatpush1.bf16.msra.mxu0 %v402
        %434 = vmatprep.subr.bf16.mxu0 0
        %435 = vmatpush2.bf16.msra.mxu0 0
        %436 = vmatprep.subr.bf16.mxu0 0
        %437 = vmatpush2.bf16.msra.mxu0 0
        %438 = vmatprep.subr.bf16.mxu0 0
        %439 = vmatpush2.bf16.msra.mxu0 0
        %440 = vmatprep.subr.bf16.mxu0 0
        %441 = vmatpush2.bf16.msra.mxu0 0
        %442 = vmatprep.subr.bf16.mxu0 0
        %443 = vmatpush2.bf16.msra.mxu0 0
        %444 = vmatprep.subr.bf16.mxu0 0
        %445 = vmatpush2.bf16.msra.mxu0 0
        %446 = vmatprep.subr.bf16.mxu0 0
        %447 = vmatpush2.bf16.msra.mxu0 0
        %448 = vmatprep.subr.bf16.mxu0 0
        %449 = vmatpush2.bf16.msra.mxu0 0
        %450 = vmatprep.mubr.bf16.mxu0 0
        %451 = vmatmul.mubr.bf16.gmra.mxu0 %v368
        %v452 = vpop.f32.mrf.mxu0
        %v453 = vadd.f32 0.0, %v452
        %v454 = vpop.f32.mrf.mxu0
        %v455 = vpop.f32.mrf.mxu0
        %v456 = vadd.f32 0.0, %v455
        %v457 = vpop.f32.mrf.mxu0
        %458 = vdwg.mxu0
        %v459 = vadd.f32 %v326, %v453
        %v460 = vadd.f32 %v327, %v456
        %v461 = vld [vmem:[%s181] sm:$0xe]
        %s462 = scalar_lea.vmem [#allocation2], 128
        %v463 = vld [vmem:[%s462] sm:$0xf]
        %v464 = vld [vmem:[%s462 + $0x4] sm:$0xf]
        %v465 = vld [vmem:[%s462 + $0x8] sm:$0xf]
        %v466 = vld [vmem:[%s462 + $0xc] sm:$0xf]
        %v467 = vld [vmem:[%s462 + $0x10] sm:$0xf]
        %v468 = vld [vmem:[%s462 + $0x14] sm:$0xf]
        %v469 = vld [vmem:[%s462 + $0x18] sm:$0xf]
        %v470 = vld [vmem:[%s462 + $0x1c] sm:$0xf]
        %v471 = vld [vmem:[%s462 + $0x20] sm:$0xf]
        %v472 = vld [vmem:[%s462 + $0x24] sm:$0xf]
        %v473 = vld [vmem:[%s462 + $0x28] sm:$0xf]
        %v474 = vld [vmem:[%s462 + $0x2c] sm:$0xf]
        %v475 = vld [vmem:[%s462 + $0x30] sm:$0xf]
        %v476 = vld [vmem:[%s462 + $0x34] sm:$0xf]
        %v477 = vld [vmem:[%s462 + $0x38] sm:$0xf]
        %v478 = vld [vmem:[%s462 + $0x3c] sm:$0xf]
        %v480 = vunpack.c.l.b16 %v461
        %v481 = vpack.c.b16 %v352, %v480
        %vm482 = vcmask 1046528
        %v483 = vrot.slane %v481, 1
        %v484 = vrot.slane %v355, 1
        %v485 = vsel %vm482, %v483, %v484
        %v503 = vunpack.c.l.b16 %v463
        %v504 = vunpack.c.l.b16 %v464
        %v505 = vunpack.c.l.b16 %v465
        %v506 = vunpack.c.l.b16 %v466
        %v507 = vunpack.c.l.b16 %v467
        %v508 = vunpack.c.l.b16 %v468
        %v509 = vunpack.c.l.b16 %v469
        %v510 = vunpack.c.l.b16 %v470
        %v511 = vunpack.c.l.b16 %v471
        %v512 = vunpack.c.l.b16 %v472
        %v513 = vunpack.c.l.b16 %v473
        %v514 = vunpack.c.l.b16 %v474
        %v515 = vunpack.c.l.b16 %v475
        %v516 = vunpack.c.l.b16 %v476
        %v517 = vunpack.c.l.b16 %v477
        %v518 = vunpack.c.l.b16 %v478
        %v519 = vpack.c.b16 %v504, %v503
        %v520 = vpack.c.b16 %v506, %v505
        %v521 = vpack.c.b16 %v508, %v507
        %v522 = vpack.c.b16 %v510, %v509
        %v523 = vpack.c.b16 %v512, %v511
        %v524 = vpack.c.b16 %v514, %v513
        %v525 = vpack.c.b16 %v516, %v515
        %v526 = vpack.c.b16 %v518, %v517
        %535 = vmatprep.subr.bf16.mxu0 0
        %536 = vmatpush1.bf16.msra.mxu0 %v526
        %537 = vmatprep.subr.bf16.mxu0 0
        %538 = vmatpush1.bf16.msra.mxu0 %v525
        %539 = vmatprep.subr.bf16.mxu0 0
        %540 = vmatpush1.bf16.msra.mxu0 %v524
        %541 = vmatprep.subr.bf16.mxu0 0
        %542 = vmatpush1.bf16.msra.mxu0 %v523
        %543 = vmatprep.subr.bf16.mxu0 0
        %544 = vmatpush1.bf16.msra.mxu0 %v522
        %545 = vmatprep.subr.bf16.mxu0 0
        %546 = vmatpush1.bf16.msra.mxu0 %v521
        %547 = vmatprep.subr.bf16.mxu0 0
        %548 = vmatpush1.bf16.msra.mxu0 %v520
        %549 = vmatprep.subr.bf16.mxu0 0
        %550 = vmatpush1.bf16.msra.mxu0 %v519
        %551 = vmatprep.subr.bf16.mxu0 0
        %552 = vmatpush2.bf16.msra.mxu0 0
        %553 = vmatprep.subr.bf16.mxu0 0
        %554 = vmatpush2.bf16.msra.mxu0 0
        %555 = vmatprep.subr.bf16.mxu0 0
        %556 = vmatpush2.bf16.msra.mxu0 0
        %557 = vmatprep.subr.bf16.mxu0 0
        %558 = vmatpush2.bf16.msra.mxu0 0
        %559 = vmatprep.subr.bf16.mxu0 0
        %560 = vmatpush2.bf16.msra.mxu0 0
        %561 = vmatprep.subr.bf16.mxu0 0
        %562 = vmatpush2.bf16.msra.mxu0 0
        %563 = vmatprep.subr.bf16.mxu0 0
        %564 = vmatpush2.bf16.msra.mxu0 0
        %565 = vmatprep.subr.bf16.mxu0 0
        %566 = vmatpush2.bf16.msra.mxu0 0
        %567 = vmatprep.mubr.bf16.mxu0 0
        %568 = vmatmul.mubr.bf16.gmra.mxu0 %v485
        %v569 = vpop.f32.mrf.mxu0
        %v570 = vadd.f32 0.0, %v569
        %v571 = vpop.f32.mrf.mxu0
        %v572 = vpop.f32.mrf.mxu0
        %v573 = vadd.f32 0.0, %v572
        %v574 = vpop.f32.mrf.mxu0
        %575 = vdwg.mxu0
        %v576 = vadd.f32 %v459, %v570
        %v577 = vadd.f32 %v460, %v573
        %578 = vst [vmem:[%s203] sm:$0xff] %v576
        %579 = vst [vmem:[%s203 + $0x8] sm:$0xff] %v577
        %s580 = sand.u32 %s97, 1
        %s581 = scalar_lea.sflag [#allocation4], %s580
        %s582 = sand.u32 %s97, 1
        %s583 = smul.addr %s582, 16
        %s584 = scalar_lea.vmem [#allocation7], %s583
        // Predicated region
        $region41: #{tpu_custom_call.1} parent=31 // pred_check
          %p585 = pneg %p107
        $region42: #{tpu_custom_call.1} parent=31 // pred_check_branch
          %587 = sbr.rel (%p585) target = $region44
        $region43: #{tpu_custom_call.1} parent=31 // pred_region
          %s588 = smul.u32 2, %s21
          %s590 = ssub.s32 256, 256
          %591 = vsyncadd %s581, %s590
          %s592 = smul.addr %s588, 128
          %s593 = scalar_lea.hbm %s3, %s592
          %s594 = sshll.u32 %s584, 4
          %s595 = int_to_ptr.vmem [resolvable:$true] %s594
          %600 = dma.vmem_to_hbm [thread:$0]  %s595, 256, %s593, %s581, 128, 128, 8
        $region44: #{tpu_custom_call.1} parent=31 // pred_fallthru
          _
      $region32: #{tpu_custom_call.1} parent=5 // pred_fallthru
        _
      %p601 = scmp.le.s32.totalorder 2, %s16
      // Predicated region
      $region45: #{tpu_custom_call.1} parent=5 // pred_check
        %p602 = pneg %p601
      $region46: #{tpu_custom_call.1} parent=5 // pred_check_branch
        %604 = sbr.rel (%p602) target = $region48
      $region47: #{tpu_custom_call.1} parent=5 // pred_region
        %s605 = ssub.s32 %s16, 2
        // Predicated region
        $region49: #{tpu_custom_call.1} parent=47 // pred_check
          %p606 = pneg %p113
        $region50: #{tpu_custom_call.1} parent=47 // pred_check_branch
          %608 = sbr.rel (%p606) target = $region52
        $region51: #{tpu_custom_call.1} parent=47 // pred_region
          %s609 = sand.u32 %s98, 1
          %s610 = scalar_lea.sflag [#allocation4], %s609
          %s611 = sand.u32 %s98, 1
          %s612 = smul.addr %s611, 16
          %s613 = scalar_lea.vmem [#allocation7], %s612
          %614 = dma.done %s610, 256
        $region52: #{tpu_custom_call.1} parent=47 // pred_fallthru
          _
      $region48: #{tpu_custom_call.1} parent=5 // pred_fallthru
        _
    $region6: #{tpu_custom_call.1} parent=1 // loop_footer
      %s20 = sadd.s32 1, %s16
    $region7: #{tpu_custom_call.1} parent=1 // loop_footer_branch
      %15 = sbr.rel target = $region3
    $region8: #{tpu_custom_call.1} parent=1 // loop_exit
      _
    %615 = vsyncpa [#allocation3], 1
    %s616 = scalar_lea.sflag [#allocation3], 1
    %617 = vsyncpa %s616, 1
    %618 = vsyncpa [#allocation6], 1
    %s619 = scalar_lea.sflag [#allocation6], 1
    %620 = vsyncpa %s619, 1
    %621 = vsyncpa [#allocation4], 1
    %s622 = scalar_lea.sflag [#allocation4], 1
    %623 = vsyncpa %s622, 1

</llo_original>
